<compile_context>
chip_gen: v5e
topology: v5e:2x2
jax: 0.10.0
libtpu: 0.0.40
codegen_flags: <defaults>
</compile_context>

<pallas_src>
import jax
import jax.numpy as jnp
from jax.experimental import pallas as pl
from jax.experimental.pallas import tpu as pltpu


def _double_conv_kernel(x_ref, w1_ref, b1_ref, w2_ref, b2_ref, o_ref,
                        slab1_ref, slab2_ref):
    """Fused (conv3x3 -> BN -> ReLU) x 2 for the whole (small) batch.

    x_ref:     (N, H, W*Cin)        input slabs (channels innermost on lanes)
    w1_ref:    (3, W*Cin, W*Cout)   block-banded conv1 weights (BN1 folded), bf16
    b1_ref:    (1, W*Cout)          conv1 bias + BN1 shift, tiled per pixel, f32
    w2_ref:    (3, W*Cout, W*Cout)  block-banded conv2 weights (BN2 folded), bf16
    b2_ref:    (1, W*Cout)          conv2 bias + BN2 shift, tiled per pixel, f32
    o_ref:     (N, H, W*Cout)       output slabs (lane-dense store)
    slab1_ref: (N*(H+2), W*Cin)  VMEM  row-stacked, zero-halo stage-1 input
    slab2_ref: (N*(H+2), W*Cout) VMEM  row-stacked, zero-halo stage-2 input
    """
    N, H, wcin = x_ref.shape
    wcout = o_ref.shape[2]
    HP = H + 2              # rows per image incl. 1-row top/bottom halo
    M = N * HP - 2          # matmul rows (last image needs no trailing pad)

    # ---- stage 1: conv3x3 (+ folded BN) + ReLU over all N images at once ----
    # Only the halo/separator rows need zeroing; dx (column) taps and the
    # left/right zero padding are folded into the banded weight matrices.
    for n in range(N):
        base = n * HP
        slab1_ref[base:base + 1, :] = jnp.zeros((1, wcin), slab1_ref.dtype)
        slab1_ref[base + 1:base + 1 + H, :] = x_ref[n]
        slab1_ref[base + H + 1:base + H + 2, :] = jnp.zeros(
            (1, wcin), slab1_ref.dtype)

    # 3 MXU matmuls (one per kernel row dy); bf16 operands, f32 accumulation.
    acc1 = jnp.dot(slab1_ref[0:M, :].astype(w1_ref.dtype), w1_ref[0],
                   preferred_element_type=jnp.float32)
    for dy in range(1, 3):
        acc1 += jnp.dot(slab1_ref[dy:dy + M, :].astype(w1_ref.dtype),
                        w1_ref[dy], preferred_element_type=jnp.float32)
    y1 = jnp.maximum(acc1 + b1_ref[...], 0.0)

    # ---- stage 2: intermediate activation stays in VMEM ----
    for n in range(N):
        base = n * HP
        slab2_ref[base:base + 1, :] = jnp.zeros((1, wcout), slab2_ref.dtype)
        slab2_ref[base + 1:base + 1 + H, :] = y1[base:base + H, :]
        slab2_ref[base + H + 1:base + H + 2, :] = jnp.zeros(
            (1, wcout), slab2_ref.dtype)

    acc2 = jnp.dot(slab2_ref[0:M, :].astype(w2_ref.dtype), w2_ref[0],
                   preferred_element_type=jnp.float32)
    for dy in range(1, 3):
        acc2 += jnp.dot(slab2_ref[dy:dy + M, :].astype(w2_ref.dtype),
                        w2_ref[dy], preferred_element_type=jnp.float32)
    y2 = jnp.maximum(acc2 + b2_ref[...], 0.0)

    # Extract only the valid rows of each image (separator rows are garbage).
    for n in range(N):
        o_ref[n] = y2[n * HP:n * HP + H, :].astype(o_ref.dtype)


def _make_band_weights(w_hwio, W):
    """Pack (3,3,Cin,Cout) HWIO weights into 3 block-banded (W*Cin, W*Cout)
    matmul operands.  Column taps (dx) and left/right zero padding are folded
    into the band (out-of-range taps stay zero).  Fully vectorized build."""
    kh, kw, cin, cout = w_hwio.shape
    cols = jnp.arange(W)
    # shift[dx, xin, xout] = 1  iff  xin == xout + dx - kw//2
    shift = (cols[None, :, None] ==
             cols[None, None, :] + jnp.arange(kw)[:, None, None] - kw // 2
             ).astype(w_hwio.dtype)
    band = jnp.einsum('xab,yxio->yaibo', shift, w_hwio)
    return band.reshape(kh, W * cin, W * cout)


def double_conv_forward(x_nhwc, params1, params2,
                        compute_dtype=jnp.bfloat16):
    """Fused (conv3x3 => BN(eval) => ReLU) * 2 via a single pallas_call."""
    N, H, W, Cin = x_nhwc.shape
    (w1, s1, b1), (w2, s2, b2) = params1, params2
    Cout = w1.shape[-1]
    assert w2.shape[-2] == Cout and w2.shape[-1] == Cout

    # Zero-pad Cin so the input slab's last dim is a multiple of 128 lanes.
    cin_pad = Cin
    if 128 % W == 0 and (W * Cin) % 128 != 0:
        cin_pad = ((-(-(W * Cin) // 128)) * 128) // W
    if cin_pad != Cin:
        x_nhwc = jnp.pad(x_nhwc, ((0, 0), (0, 0), (0, 0), (0, cin_pad - Cin)))
        w1 = jnp.pad(w1, ((0, 0), (0, 0), (0, cin_pad - Cin), (0, 0)))

    # Fold eval-mode BN scale into the conv weights; pack as banded bf16 operands.
    wband1 = _make_band_weights(w1 * s1, W).astype(compute_dtype)
    wband2 = _make_band_weights(w2 * s2, W).astype(compute_dtype)
    bwide1 = jnp.tile(b1, W).reshape(1, W * Cout).astype(jnp.float32)
    bwide2 = jnp.tile(b2, W).reshape(1, W * Cout).astype(jnp.float32)

    WCin, WCout = W * cin_pad, W * Cout
    x_slab = x_nhwc.reshape(N, H, WCin)   # free contiguous collapse

    out = pl.pallas_call(
        _double_conv_kernel,
        out_shape=jax.ShapeDtypeStruct((N, H, WCout), x_nhwc.dtype),
        grid_spec=pltpu.PrefetchScalarGridSpec(
            num_scalar_prefetch=0,
            grid=(1,),   # whole batch in one step (v5e/v6e: single TensorCore)
            in_specs=[
                pl.BlockSpec((N, H, WCin), lambda i: (0, 0, 0)),
                pl.BlockSpec((3, WCin, WCout), lambda i: (0, 0, 0)),
                pl.BlockSpec((1, WCout), lambda i: (0, 0)),
                pl.BlockSpec((3, WCout, WCout), lambda i: (0, 0, 0)),
                pl.BlockSpec((1, WCout), lambda i: (0, 0)),
            ],
            out_specs=pl.BlockSpec((N, H, WCout), lambda i: (0, 0, 0)),
            scratch_shapes=[
                pltpu.VMEM((N * (H + 2), WCin), jnp.float32),
                pltpu.VMEM((N * (H + 2), WCout), jnp.float32),
            ],
        ),
        compiler_params=pltpu.CompilerParams(
            dimension_semantics=("arbitrary",)),
    )(x_slab, wband1, bwide1, wband2, bwide2)

    return out.reshape(N, H, W, Cout)


def make_conv_bn_params(key, in_ch, out_ch, eps=1e-5):
    """Deterministic synthetic params for Conv2d(3x3, bias=True) + BatchNorm2d."""
    k1, k2, k3, k4, k5, k6 = jax.random.split(key, 6)
    # PyTorch OIHW -> HWIO
    w_oihw = jax.random.normal(k1, (out_ch, in_ch, 3, 3), jnp.float32) * 0.1
    w_hwio = jnp.transpose(w_oihw, (2, 3, 1, 0))
    conv_b = jax.random.normal(k2, (out_ch,), jnp.float32) * 0.1
    gamma = 1.0 + 0.1 * jax.random.normal(k3, (out_ch,), jnp.float32)
    beta = 0.1 * jax.random.normal(k4, (out_ch,), jnp.float32)
    running_mean = 0.1 * jax.random.normal(k5, (out_ch,), jnp.float32)
    running_var = jnp.abs(1.0 + 0.1 * jax.random.normal(k6, (out_ch,), jnp.float32))
    scale = gamma / jnp.sqrt(running_var + eps)       # BN scale (folded into w)
    bias = (conv_b - running_mean) * scale + beta     # conv bias + BN shift
    return w_hwio, scale, bias


def inconv_forward(x_nchw, params1, params2):
    """inconv.forward: (conv=>BN=>ReLU) * 2.  Input NCHW (PyTorch convention).
    Note: at real sizes prefer the NHWC entry point (double_conv_forward) to
    avoid two full-array HBM transposes around the fused kernel."""
    x = jnp.transpose(x_nchw, (0, 2, 3, 1))           # NCHW -> NHWC
    y = double_conv_forward(x, params1, params2)      # NHWC
    return jnp.transpose(y, (0, 3, 1, 2))             # NHWC -> NCHW


# ---------------- pure-JAX reference ----------------
def _ref_conv_bn_relu(x_nhwc, w_hwio, scale, bias):
    y = jax.lax.conv_general_dilated(
        x_nhwc, w_hwio, window_strides=(1, 1), padding="SAME",
        dimension_numbers=("NHWC", "HWIO", "NHWC"),
        precision=jax.lax.Precision.HIGHEST)
    return jnp.maximum(y * scale + bias, 0.0)


def _ref_inconv(x_nchw, params1, params2):
    x = jnp.transpose(x_nchw, (0, 2, 3, 1))
    x = _ref_conv_bn_relu(x, *params1)
    x = _ref_conv_bn_relu(x, *params2)
    return jnp.transpose(x, (0, 3, 1, 2))


if __name__ == "__main__":
    key = jax.random.PRNGKey(0)
    kx, kp1, kp2 = jax.random.split(key, 3)

    N, in_ch, out_ch, H, W = 2, 4, 8, 16, 16
    x = jax.random.normal(kx, (N, in_ch, H, W), jnp.float32)  # NCHW like PyTorch

    params1 = make_conv_bn_params(kp1, in_ch, out_ch)
    params2 = make_conv_bn_params(kp2, out_ch, out_ch)

    out = jax.block_until_ready(inconv_forward(x, params1, params2))

    ref = _ref_inconv(x, params1, params2)
    assert out.shape == (N, out_ch, H, W), out.shape
    max_err = float(jnp.max(jnp.abs(out - ref)))
    # bf16 MXU operands (f32 accumulation) vs f32 HIGHEST-precision reference:
    # expected error is ~1e-2-level over two stacked 3x3 convs, hence 3e-2.
    assert jnp.allclose(out, ref, atol=3e-2, rtol=3e-2), f"mismatch: {max_err}"

    print("KERNEL_OK")
</pallas_src>

<mosaic_0001>
module attributes {stable_mosaic.version = 11 : i64} {
  func.func @_double_conv_kernel(%arg0: i32, %arg1: memref<2x16x128xf32, #tpu.memory_space<vmem>>, %arg2: memref<3x128x128xbf16, #tpu.memory_space<vmem>>, %arg3: memref<1x128xf32, #tpu.memory_space<vmem>>, %arg4: memref<3x128x128xbf16, #tpu.memory_space<vmem>>, %arg5: memref<1x128xf32, #tpu.memory_space<vmem>>, %arg6: memref<2x16x128xf32, #tpu.memory_space<vmem>>, %arg7: memref<36x128xf32, #tpu.memory_space<vmem>>, %arg8: memref<36x128xf32, #tpu.memory_space<vmem>>) attributes {dimension_semantics = [#tpu.dimension_semantics<arbitrary>], iteration_bounds = array<i64: 1>, scalar_prefetch = 0 : i64, scratch_operands = 2 : i64, tpu.core_type = #tpu.core_type<tc>, window_params = [{pipeline_mode = #tpu.pipeline_mode<synchronous>, transform_indices = @transform_0, window_bounds = array<i64: 2, 16, 128>}, {pipeline_mode = #tpu.pipeline_mode<synchronous>, transform_indices = @transform_1, window_bounds = array<i64: 3, 128, 128>}, {pipeline_mode = #tpu.pipeline_mode<synchronous>, transform_indices = @transform_2, window_bounds = array<i64: 1, 128>}, {pipeline_mode = #tpu.pipeline_mode<synchronous>, transform_indices = @transform_3, window_bounds = array<i64: 3, 128, 128>}, {pipeline_mode = #tpu.pipeline_mode<synchronous>, transform_indices = @transform_4, window_bounds = array<i64: 1, 128>}, {pipeline_mode = #tpu.pipeline_mode<synchronous>, transform_indices = @transform_5, window_bounds = array<i64: 2, 16, 128>}]} {
    %cst = arith.constant 0.000000e+00 : f32
    %0 = vector.broadcast %cst : f32 to vector<1x128xf32>
    %c0 = arith.constant 0 : index
    %c0_0 = arith.constant 0 : index
    %1 = vector.load %arg7[%c0, %c0_0] : memref<36x128xf32, #tpu.memory_space<vmem>>, vector<1x128xf32>
    tpu.vector_store %arg7[%c0, %c0_0], %0 {strides = array<i32>} : memref<36x128xf32, #tpu.memory_space<vmem>>, vector<1x128xf32>,
    %c0_1 = arith.constant 0 : index
    %c0_2 = arith.constant 0 : index
    %c0_3 = arith.constant 0 : index
    %2 = vector.load %arg1[%c0_1, %c0_2, %c0_3] : memref<2x16x128xf32, #tpu.memory_space<vmem>>, vector<1x16x128xf32>
    %3 = vector.shape_cast %2 : vector<1x16x128xf32> to vector<16x128xf32>
    %c1 = arith.constant 1 : index
    %c0_4 = arith.constant 0 : index
    %4 = vector.load %arg7[%c1, %c0_4] : memref<36x128xf32, #tpu.memory_space<vmem>>, vector<16x128xf32>
    tpu.vector_store %arg7[%c1, %c0_4], %3 {strides = array<i32>} : memref<36x128xf32, #tpu.memory_space<vmem>>, vector<16x128xf32>,
    %cst_5 = arith.constant 0.000000e+00 : f32
    %5 = vector.broadcast %cst_5 : f32 to vector<1x128xf32>
    %c17 = arith.constant 17 : index
    %c0_6 = arith.constant 0 : index
    %6 = vector.load %arg7[%c17, %c0_6] : memref<36x128xf32, #tpu.memory_space<vmem>>, vector<1x128xf32>
    tpu.vector_store %arg7[%c17, %c0_6], %5 {strides = array<i32>} : memref<36x128xf32, #tpu.memory_space<vmem>>, vector<1x128xf32>,
    %cst_7 = arith.constant 0.000000e+00 : f32
    %7 = vector.broadcast %cst_7 : f32 to vector<1x128xf32>
    %c18 = arith.constant 18 : index
    %c0_8 = arith.constant 0 : index
    %8 = vector.load %arg7[%c18, %c0_8] : memref<36x128xf32, #tpu.memory_space<vmem>>, vector<1x128xf32>
    tpu.vector_store %arg7[%c18, %c0_8], %7 {strides = array<i32>} : memref<36x128xf32, #tpu.memory_space<vmem>>, vector<1x128xf32>,
    %c1_9 = arith.constant 1 : index
    %c0_10 = arith.constant 0 : index
    %c0_11 = arith.constant 0 : index
    %9 = vector.load %arg1[%c1_9, %c0_10, %c0_11] : memref<2x16x128xf32, #tpu.memory_space<vmem>>, vector<1x16x128xf32>
    %10 = vector.shape_cast %9 : vector<1x16x128xf32> to vector<16x128xf32>
    %c19 = arith.constant 19 : index
    %c0_12 = arith.constant 0 : index
    %11 = vector.load %arg7[%c19, %c0_12] : memref<36x128xf32, #tpu.memory_space<vmem>>, vector<16x128xf32>
    tpu.vector_store %arg7[%c19, %c0_12], %10 {strides = array<i32>} : memref<36x128xf32, #tpu.memory_space<vmem>>, vector<16x128xf32>,
    %cst_13 = arith.constant 0.000000e+00 : f32
    %12 = vector.broadcast %cst_13 : f32 to vector<1x128xf32>
    %c35 = arith.constant 35 : index
    %c0_14 = arith.constant 0 : index
    %13 = vector.load %arg7[%c35, %c0_14] : memref<36x128xf32, #tpu.memory_space<vmem>>, vector<1x128xf32>
    tpu.vector_store %arg7[%c35, %c0_14], %12 {strides = array<i32>} : memref<36x128xf32, #tpu.memory_space<vmem>>, vector<1x128xf32>,
    %c0_15 = arith.constant 0 : index
    %c0_16 = arith.constant 0 : index
    %14 = vector.load %arg7[%c0_15, %c0_16] : memref<36x128xf32, #tpu.memory_space<vmem>>, vector<34x128xf32>
    %15 = arith.truncf %14 : vector<34x128xf32> to vector<34x128xbf16>
    %c0_17 = arith.constant 0 : index
    %c0_18 = arith.constant 0 : index
    %c0_19 = arith.constant 0 : index
    %16 = vector.load %arg2[%c0_17, %c0_18, %c0_19] : memref<3x128x128xbf16, #tpu.memory_space<vmem>>, vector<1x128x128xbf16>
    %17 = vector.shape_cast %16 : vector<1x128x128xbf16> to vector<128x128xbf16>
    %cst_20 = arith.constant dense<0.000000e+00> : vector<34x128xf32>
    %18 = tpu.matmul %15, %17, %cst_20 {dimension_numbers = #tpu.dot_dimension_numbers<[1], [0], [0], [1], [0, 0, 1, 1], [], []>} : vector<34x128xbf16>, vector<128x128xbf16>, vector<34x128xf32> -> vector<34x128xf32>
    %c1_21 = arith.constant 1 : index
    %c0_22 = arith.constant 0 : index
    %19 = vector.load %arg7[%c1_21, %c0_22] : memref<36x128xf32, #tpu.memory_space<vmem>>, vector<34x128xf32>
    %20 = arith.truncf %19 : vector<34x128xf32> to vector<34x128xbf16>
    %c1_23 = arith.constant 1 : index
    %c0_24 = arith.constant 0 : index
    %c0_25 = arith.constant 0 : index
    %21 = vector.load %arg2[%c1_23, %c0_24, %c0_25] : memref<3x128x128xbf16, #tpu.memory_space<vmem>>, vector<1x128x128xbf16>
    %22 = vector.shape_cast %21 : vector<1x128x128xbf16> to vector<128x128xbf16>
    %cst_26 = arith.constant dense<0.000000e+00> : vector<34x128xf32>
    %23 = tpu.matmul %20, %22, %cst_26 {dimension_numbers = #tpu.dot_dimension_numbers<[1], [0], [0], [1], [0, 0, 1, 1], [], []>} : vector<34x128xbf16>, vector<128x128xbf16>, vector<34x128xf32> -> vector<34x128xf32>
    %24 = arith.addf %18, %23 : vector<34x128xf32>
    %c2 = arith.constant 2 : index
    %c0_27 = arith.constant 0 : index
    %25 = vector.load %arg7[%c2, %c0_27] : memref<36x128xf32, #tpu.memory_space<vmem>>, vector<34x128xf32>
    %26 = arith.truncf %25 : vector<34x128xf32> to vector<34x128xbf16>
    %c2_28 = arith.constant 2 : index
    %c0_29 = arith.constant 0 : index
    %c0_30 = arith.constant 0 : index
    %27 = vector.load %arg2[%c2_28, %c0_29, %c0_30] : memref<3x128x128xbf16, #tpu.memory_space<vmem>>, vector<1x128x128xbf16>
    %28 = vector.shape_cast %27 : vector<1x128x128xbf16> to vector<128x128xbf16>
    %cst_31 = arith.constant dense<0.000000e+00> : vector<34x128xf32>
    %29 = tpu.matmul %26, %28, %cst_31 {dimension_numbers = #tpu.dot_dimension_numbers<[1], [0], [0], [1], [0, 0, 1, 1], [], []>} : vector<34x128xbf16>, vector<128x128xbf16>, vector<34x128xf32> -> vector<34x128xf32>
    %30 = arith.addf %24, %29 : vector<34x128xf32>
    %c0_32 = arith.constant 0 : index
    %c0_33 = arith.constant 0 : index
    %31 = vector.load %arg3[%c0_32, %c0_33] : memref<1x128xf32, #tpu.memory_space<vmem>>, vector<1x128xf32>
    %32 = vector.broadcast %31 : vector<1x128xf32> to vector<34x128xf32>
    %33 = arith.addf %30, %32 : vector<34x128xf32>
    %cst_34 = arith.constant 0.000000e+00 : f32
    %34 = vector.broadcast %cst_34 : f32 to vector<34x128xf32>
    %35 = arith.maximumf %33, %34 : vector<34x128xf32>
    %cst_35 = arith.constant 0.000000e+00 : f32
    %36 = vector.broadcast %cst_35 : f32 to vector<1x128xf32>
    %c0_36 = arith.constant 0 : index
    %c0_37 = arith.constant 0 : index
    %37 = vector.load %arg8[%c0_36, %c0_37] : memref<36x128xf32, #tpu.memory_space<vmem>>, vector<1x128xf32>
    tpu.vector_store %arg8[%c0_36, %c0_37], %36 {strides = array<i32>} : memref<36x128xf32, #tpu.memory_space<vmem>>, vector<1x128xf32>,
    %38 = vector.extract_strided_slice %35 {offsets = [0, 0], sizes = [16, 128], strides = [1, 1]} : vector<34x128xf32> to vector<16x128xf32>
    %c1_38 = arith.constant 1 : index
    %c0_39 = arith.constant 0 : index
    %39 = vector.load %arg8[%c1_38, %c0_39] : memref<36x128xf32, #tpu.memory_space<vmem>>, vector<16x128xf32>
    tpu.vector_store %arg8[%c1_38, %c0_39], %38 {strides = array<i32>} : memref<36x128xf32, #tpu.memory_space<vmem>>, vector<16x128xf32>,
    %cst_40 = arith.constant 0.000000e+00 : f32
    %40 = vector.broadcast %cst_40 : f32 to vector<1x128xf32>
    %c17_41 = arith.constant 17 : index
    %c0_42 = arith.constant 0 : index
    %41 = vector.load %arg8[%c17_41, %c0_42] : memref<36x128xf32, #tpu.memory_space<vmem>>, vector<1x128xf32>
    tpu.vector_store %arg8[%c17_41, %c0_42], %40 {strides = array<i32>} : memref<36x128xf32, #tpu.memory_space<vmem>>, vector<1x128xf32>,
    %cst_43 = arith.constant 0.000000e+00 : f32
    %42 = vector.broadcast %cst_43 : f32 to vector<1x128xf32>
    %c18_44 = arith.constant 18 : index
    %c0_45 = arith.constant 0 : index
    %43 = vector.load %arg8[%c18_44, %c0_45] : memref<36x128xf32, #tpu.memory_space<vmem>>, vector<1x128xf32>
    tpu.vector_store %arg8[%c18_44, %c0_45], %42 {strides = array<i32>} : memref<36x128xf32, #tpu.memory_space<vmem>>, vector<1x128xf32>,
    %44 = vector.extract_strided_slice %35 {offsets = [18, 0], sizes = [16, 128], strides = [1, 1]} : vector<34x128xf32> to vector<16x128xf32>
    %c19_46 = arith.constant 19 : index
    %c0_47 = arith.constant 0 : index
    %45 = vector.load %arg8[%c19_46, %c0_47] : memref<36x128xf32, #tpu.memory_space<vmem>>, vector<16x128xf32>
    tpu.vector_store %arg8[%c19_46, %c0_47], %44 {strides = array<i32>} : memref<36x128xf32, #tpu.memory_space<vmem>>, vector<16x128xf32>,
    %cst_48 = arith.constant 0.000000e+00 : f32
    %46 = vector.broadcast %cst_48 : f32 to vector<1x128xf32>
    %c35_49 = arith.constant 35 : index
    %c0_50 = arith.constant 0 : index
    %47 = vector.load %arg8[%c35_49, %c0_50] : memref<36x128xf32, #tpu.memory_space<vmem>>, vector<1x128xf32>
    tpu.vector_store %arg8[%c35_49, %c0_50], %46 {strides = array<i32>} : memref<36x128xf32, #tpu.memory_space<vmem>>, vector<1x128xf32>,
    %c0_51 = arith.constant 0 : index
    %c0_52 = arith.constant 0 : index
    %48 = vector.load %arg8[%c0_51, %c0_52] : memref<36x128xf32, #tpu.memory_space<vmem>>, vector<34x128xf32>
    %49 = arith.truncf %48 : vector<34x128xf32> to vector<34x128xbf16>
    %c0_53 = arith.constant 0 : index
    %c0_54 = arith.constant 0 : index
    %c0_55 = arith.constant 0 : index
    %50 = vector.load %arg4[%c0_53, %c0_54, %c0_55] : memref<3x128x128xbf16, #tpu.memory_space<vmem>>, vector<1x128x128xbf16>
    %51 = vector.shape_cast %50 : vector<1x128x128xbf16> to vector<128x128xbf16>
    %cst_56 = arith.constant dense<0.000000e+00> : vector<34x128xf32>
    %52 = tpu.matmul %49, %51, %cst_56 {dimension_numbers = #tpu.dot_dimension_numbers<[1], [0], [0], [1], [0, 0, 1, 1], [], []>} : vector<34x128xbf16>, vector<128x128xbf16>, vector<34x128xf32> -> vector<34x128xf32>
    %c1_57 = arith.constant 1 : index
    %c0_58 = arith.constant 0 : index
    %53 = vector.load %arg8[%c1_57, %c0_58] : memref<36x128xf32, #tpu.memory_space<vmem>>, vector<34x128xf32>
    %54 = arith.truncf %53 : vector<34x128xf32> to vector<34x128xbf16>
    %c1_59 = arith.constant 1 : index
    %c0_60 = arith.constant 0 : index
    %c0_61 = arith.constant 0 : index
    %55 = vector.load %arg4[%c1_59, %c0_60, %c0_61] : memref<3x128x128xbf16, #tpu.memory_space<vmem>>, vector<1x128x128xbf16>
    %56 = vector.shape_cast %55 : vector<1x128x128xbf16> to vector<128x128xbf16>
    %cst_62 = arith.constant dense<0.000000e+00> : vector<34x128xf32>
    %57 = tpu.matmul %54, %56, %cst_62 {dimension_numbers = #tpu.dot_dimension_numbers<[1], [0], [0], [1], [0, 0, 1, 1], [], []>} : vector<34x128xbf16>, vector<128x128xbf16>, vector<34x128xf32> -> vector<34x128xf32>
    %58 = arith.addf %52, %57 : vector<34x128xf32>
    %c2_63 = arith.constant 2 : index
    %c0_64 = arith.constant 0 : index
    %59 = vector.load %arg8[%c2_63, %c0_64] : memref<36x128xf32, #tpu.memory_space<vmem>>, vector<34x128xf32>
    %60 = arith.truncf %59 : vector<34x128xf32> to vector<34x128xbf16>
    %c2_65 = arith.constant 2 : index
    %c0_66 = arith.constant 0 : index
    %c0_67 = arith.constant 0 : index
    %61 = vector.load %arg4[%c2_65, %c0_66, %c0_67] : memref<3x128x128xbf16, #tpu.memory_space<vmem>>, vector<1x128x128xbf16>
    %62 = vector.shape_cast %61 : vector<1x128x128xbf16> to vector<128x128xbf16>
    %cst_68 = arith.constant dense<0.000000e+00> : vector<34x128xf32>
    %63 = tpu.matmul %60, %62, %cst_68 {dimension_numbers = #tpu.dot_dimension_numbers<[1], [0], [0], [1], [0, 0, 1, 1], [], []>} : vector<34x128xbf16>, vector<128x128xbf16>, vector<34x128xf32> -> vector<34x128xf32>
    %64 = arith.addf %58, %63 : vector<34x128xf32>
    %c0_69 = arith.constant 0 : index
    %c0_70 = arith.constant 0 : index
    %65 = vector.load %arg5[%c0_69, %c0_70] : memref<1x128xf32, #tpu.memory_space<vmem>>, vector<1x128xf32>
    %66 = vector.broadcast %65 : vector<1x128xf32> to vector<34x128xf32>
    %67 = arith.addf %64, %66 : vector<34x128xf32>
    %cst_71 = arith.constant 0.000000e+00 : f32
    %68 = vector.broadcast %cst_71 : f32 to vector<34x128xf32>
    %69 = arith.maximumf %67, %68 : vector<34x128xf32>
    %70 = vector.extract_strided_slice %69 {offsets = [0, 0], sizes = [16, 128], strides = [1, 1]} : vector<34x128xf32> to vector<16x128xf32>
    %c0_72 = arith.constant 0 : index
    %c0_73 = arith.constant 0 : index
    %c0_74 = arith.constant 0 : index
    %71 = vector.load %arg6[%c0_72, %c0_73, %c0_74] : memref<2x16x128xf32, #tpu.memory_space<vmem>>, vector<1x16x128xf32>
    %72 = vector.shape_cast %71 : vector<1x16x128xf32> to vector<16x128xf32>
    %73 = vector.shape_cast %70 : vector<16x128xf32> to vector<1x16x128xf32>
    tpu.vector_store %arg6[%c0_72, %c0_73, %c0_74], %73 {strides = array<i32>} : memref<2x16x128xf32, #tpu.memory_space<vmem>>, vector<1x16x128xf32>,
    %74 = vector.extract_strided_slice %69 {offsets = [18, 0], sizes = [16, 128], strides = [1, 1]} : vector<34x128xf32> to vector<16x128xf32>
    %c1_75 = arith.constant 1 : index
    %c0_76 = arith.constant 0 : index
    %c0_77 = arith.constant 0 : index
    %75 = vector.load %arg6[%c1_75, %c0_76, %c0_77] : memref<2x16x128xf32, #tpu.memory_space<vmem>>, vector<1x16x128xf32>
    %76 = vector.shape_cast %75 : vector<1x16x128xf32> to vector<16x128xf32>
    %77 = vector.shape_cast %74 : vector<16x128xf32> to vector<1x16x128xf32>
    tpu.vector_store %arg6[%c1_75, %c0_76, %c0_77], %77 {strides = array<i32>} : memref<2x16x128xf32, #tpu.memory_space<vmem>>, vector<1x16x128xf32>,
    return
  }
  func.func @transform_0(%arg0: i32) -> (i32, i32, i32) {
    %c0_i32 = arith.constant 0 : i32
    %c0_i32_0 = arith.constant 0 : i32
    %c0_i32_1 = arith.constant 0 : i32
    %c0_i32_2 = arith.constant 0 : i32
    return %c0_i32, %c0_i32_0, %c0_i32_1 : i32, i32, i32
  }
  func.func @transform_1(%arg0: i32) -> (i32, i32, i32) {
    %c0_i32 = arith.constant 0 : i32
    %c0_i32_0 = arith.constant 0 : i32
    %c0_i32_1 = arith.constant 0 : i32
    %c0_i32_2 = arith.constant 0 : i32
    return %c0_i32, %c0_i32_0, %c0_i32_1 : i32, i32, i32
  }
  func.func @transform_2(%arg0: i32) -> (i32, i32) {
    %c0_i32 = arith.constant 0 : i32
    %c0_i32_0 = arith.constant 0 : i32
    %c0_i32_1 = arith.constant 0 : i32
    return %c0_i32, %c0_i32_0 : i32, i32
  }
  func.func @transform_3(%arg0: i32) -> (i32, i32, i32) {
    %c0_i32 = arith.constant 0 : i32
    %c0_i32_0 = arith.constant 0 : i32
    %c0_i32_1 = arith.constant 0 : i32
    %c0_i32_2 = arith.constant 0 : i32
    return %c0_i32, %c0_i32_0, %c0_i32_1 : i32, i32, i32
  }
  func.func @transform_4(%arg0: i32) -> (i32, i32) {
    %c0_i32 = arith.constant 0 : i32
    %c0_i32_0 = arith.constant 0 : i32
    %c0_i32_1 = arith.constant 0 : i32
    return %c0_i32, %c0_i32_0 : i32, i32
  }
  func.func @transform_5(%arg0: i32) -> (i32, i32, i32) {
    %c0_i32 = arith.constant 0 : i32
    %c0_i32_0 = arith.constant 0 : i32
    %c0_i32_1 = arith.constant 0 : i32
    %c0_i32_2 = arith.constant 0 : i32
    return %c0_i32, %c0_i32_0, %c0_i32_1 : i32, i32, i32
  }
}

</mosaic_0001>

<llo_original>
// kernel: tpu_custom_call.1
$region0: #{tpu_custom_call.1}
  #allocation0 [shape = 'u32[]', space=smem, size = 0x4, offset = 0x4, fixed_abs, tag = 'smem constant byte address 0x4 - core index']
  #allocation1 [shape = 'u32[72,128]{1,0:T(1,128)}', space=vmem, size = 0x9000, scoped, tag = 'internal scratch']
  #allocation2 [shape = 'f32[36,128]{1,0:T(8,128)}', space=vmem, size = 0x5000, scoped, tag = 'scratch operand']
  #allocation3 [shape = 'f32[36,128]{1,0:T(8,128)}', space=vmem, size = 0x5000, scoped, tag = 'scratch operand']
  %s0 = inlined_call_operand.hbm [shape: f32[2,16,128], index: 0, kind: input, shape index: {}]
  %s1 = inlined_call_operand.hbm [shape: bf16[3,128,128], index: 1, kind: input, shape index: {}]
  %s2 = inlined_call_operand.vmem [shape: f32[1,128], index: 2, kind: input, shape index: {}]
  %s3 = inlined_call_operand.hbm [shape: bf16[3,128,128], index: 3, kind: input, shape index: {}]
  %s4 = inlined_call_operand.vmem [shape: f32[1,128], index: 4, kind: input, shape index: {}]
  %s5 = inlined_call_operand.hbm [shape: f32[2,16,128], index: 5, kind: output, shape index: {}]
  %s6 = sld [smem:[#allocation0]]
  $region42: #{tpu_custom_call.1} parent=0
    _
  %s8 = ssub.s32 1, %s6
  %s9 = scalar_select 0, %s8, %s6
  $region1: #{tpu_custom_call.1} parent=0
    #allocation4 [shape = 'u8[16384]{0}', space=vmem, size = 0x4000, scoped, tag = 'input window, operand 0, single buffered']
    #allocation5 [shape = 's32[1]{0}', space=sflag, size = 0x4, scoped, tag = 'scoped memory for tpu_custom_call.1']
    #allocation6 [shape = 's32[1]{0}', space=sflag, size = 0x4, scoped, tag = 'scoped memory for tpu_custom_call.1']
    #allocation7 [shape = 'u8[98304]{0}', space=vmem, size = 0x18000, scoped, tag = 'input window, operand 1, single buffered']
    #allocation8 [shape = 's32[1]{0}', space=sflag, size = 0x4, scoped, tag = 'scoped memory for tpu_custom_call.1']
    #allocation9 [shape = 'u8[98304]{0}', space=vmem, size = 0x18000, scoped, tag = 'input window, operand 3, single buffered']
    #allocation10 [shape = 'u8[16384]{0}', space=vmem, size = 0x4000, scoped, tag = 'output window, operand 0, single buffered']
    %10 = vsyncpa [#allocation5], 0
    %11 = vsyncpa [#allocation8], 0
    %12 = vsyncpa [#allocation6], 0
    // Predicated region
    $region2: #{tpu_custom_call.1} parent=1 // pred_check
      _
    $region3: #{tpu_custom_call.1} parent=1 // pred_check_branch
      %14 = sbr.rel (0) target = $region5
    $region4: #{tpu_custom_call.1} parent=1 // pred_region
      %16 = vsyncadd [#allocation5], 0
      %s17 = sshll.u32 %s0, 4
      %s18 = int_to_ptr.hbm [resolvable:$true] %s17
      %s19 = sshll.u32 [#allocation4], 4
      %s20 = int_to_ptr.vmem [resolvable:$true] %s19
      %25 = dma.hbm_to_vmem [thread:$0]  %s18, 512, %s20, [#allocation5], 128, 128, 8
    $region5: #{tpu_custom_call.1} parent=1 // pred_fallthru
      _
    // Predicated region
    $region6: #{tpu_custom_call.1} parent=1 // pred_check
      _
    $region7: #{tpu_custom_call.1} parent=1 // pred_check_branch
      %27 = sbr.rel (0) target = $region9
    $region8: #{tpu_custom_call.1} parent=1 // pred_region
      %29 = vsyncadd [#allocation8], 0
      %s30 = sshll.u32 %s1, 4
      %s31 = int_to_ptr.hbm [resolvable:$true] %s30
      %s32 = sshll.u32 [#allocation7], 4
      %s33 = int_to_ptr.vmem [resolvable:$true] %s32
      %38 = dma.hbm_to_vmem [thread:$0]  %s31, 3072, %s33, [#allocation8], 64, 64, 4
    $region9: #{tpu_custom_call.1} parent=1 // pred_fallthru
      _
    // Predicated region
    $region10: #{tpu_custom_call.1} parent=1 // pred_check
      _
    $region11: #{tpu_custom_call.1} parent=1 // pred_check_branch
      %40 = sbr.rel (0) target = $region13
    $region12: #{tpu_custom_call.1} parent=1 // pred_region
      _
    $region13: #{tpu_custom_call.1} parent=1 // pred_fallthru
      _
    // Predicated region
    $region14: #{tpu_custom_call.1} parent=1 // pred_check
      _
    $region15: #{tpu_custom_call.1} parent=1 // pred_check_branch
      %42 = sbr.rel (0) target = $region17
    $region16: #{tpu_custom_call.1} parent=1 // pred_region
      %44 = vsyncadd [#allocation8], 0
      %s45 = sshll.u32 %s3, 4
      %s46 = int_to_ptr.hbm [resolvable:$true] %s45
      %s47 = sshll.u32 [#allocation9], 4
      %s48 = int_to_ptr.vmem [resolvable:$true] %s47
      %53 = dma.hbm_to_vmem [thread:$0]  %s46, 3072, %s48, [#allocation8], 64, 64, 4
    $region17: #{tpu_custom_call.1} parent=1 // pred_fallthru
      _
    // Predicated region
    $region18: #{tpu_custom_call.1} parent=1 // pred_check
      _
    $region19: #{tpu_custom_call.1} parent=1 // pred_check_branch
      %55 = sbr.rel (0) target = $region21
    $region20: #{tpu_custom_call.1} parent=1 // pred_region
      _
    $region21: #{tpu_custom_call.1} parent=1 // pred_fallthru
      _
    // Predicated region
    $region22: #{tpu_custom_call.1} parent=1 // pred_check
      _
    $region23: #{tpu_custom_call.1} parent=1 // pred_check_branch
      %57 = sbr.rel (0) target = $region25
    $region24: #{tpu_custom_call.1} parent=1 // pred_region
      %59 = dma.done [#allocation5], 512
    $region25: #{tpu_custom_call.1} parent=1 // pred_fallthru
      _
    // Predicated region
    $region26: #{tpu_custom_call.1} parent=1 // pred_check
      _
    $region27: #{tpu_custom_call.1} parent=1 // pred_check_branch
      %61 = sbr.rel (0) target = $region29
    $region28: #{tpu_custom_call.1} parent=1 // pred_region
      %63 = dma.done [#allocation8], 3072
    $region29: #{tpu_custom_call.1} parent=1 // pred_fallthru
      _
    // Predicated region
    $region30: #{tpu_custom_call.1} parent=1 // pred_check
      _
    $region31: #{tpu_custom_call.1} parent=1 // pred_check_branch
      %65 = sbr.rel (0) target = $region33
    $region32: #{tpu_custom_call.1} parent=1 // pred_region
      %67 = dma.done [#allocation8], 3072
    $region33: #{tpu_custom_call.1} parent=1 // pred_fallthru
      _
    %68 = vst [vmem:[#allocation2] sm:$0x1] 0.0
    %v69 = vld [vmem:[#allocation4] sm:$0xff]
    %v70 = vld [vmem:[#allocation4 + $0x8] sm:$0xff]
    %71 = vst [vmem:[#allocation2 + $0x1] sm:$0xff] %v69
    %72 = vst [vmem:[#allocation2 + $0x9] sm:$0xff] %v70
    %73 = vst [vmem:[#allocation2 + $0x11] sm:$0x1] 0.0
    %74 = vst [vmem:[#allocation2 + $0x12] sm:$0x1] 0.0
    %s75 = scalar_lea.vmem [#allocation4], 16
    %v76 = vld [vmem:[%s75] sm:$0xff]
    %v77 = vld [vmem:[%s75 + $0x8] sm:$0xff]
    %78 = vst [vmem:[#allocation2 + $0x13] sm:$0xff] %v76
    %79 = vst [vmem:[#allocation2 + $0x1b] sm:$0xff] %v77
    %80 = vst [vmem:[#allocation2 + $0x23] sm:$0x1] 0.0
    %v81 = vld [vmem:[#allocation2] sm:$0xff]
    %v82 = vld [vmem:[#allocation2 + $0x8] sm:$0xff]
    %v83 = vld [vmem:[#allocation2 + $0x10] sm:$0xff]
    %v84 = vld [vmem:[#allocation2 + $0x18] sm:$0xff]
    %v85 = vld [vmem:[#allocation2 + $0x20] sm:$0x3]
    %v86 = vpack.c.bf16 %v82, %v81
    %v87 = vpack.c.bf16 %v84, %v83
    %v88 = vpack.c.bf16 %v85, %v85
    %v89 = vld [vmem:[#allocation7] sm:$0xf]
    %v90 = vld [vmem:[#allocation7 + $0x4] sm:$0xf]
    %v91 = vld [vmem:[#allocation7 + $0x8] sm:$0xf]
    %v92 = vld [vmem:[#allocation7 + $0xc] sm:$0xf]
    %v93 = vld [vmem:[#allocation7 + $0x10] sm:$0xf]
    %v94 = vld [vmem:[#allocation7 + $0x14] sm:$0xf]
    %v95 = vld [vmem:[#allocation7 + $0x18] sm:$0xf]
    %v96 = vld [vmem:[#allocation7 + $0x1c] sm:$0xf]
    %v97 = vld [vmem:[#allocation7 + $0x20] sm:$0xf]
    %v98 = vld [vmem:[#allocation7 + $0x24] sm:$0xf]
    %v99 = vld [vmem:[#allocation7 + $0x28] sm:$0xf]
    %v100 = vld [vmem:[#allocation7 + $0x2c] sm:$0xf]
    %v101 = vld [vmem:[#allocation7 + $0x30] sm:$0xf]
    %v102 = vld [vmem:[#allocation7 + $0x34] sm:$0xf]
    %v103 = vld [vmem:[#allocation7 + $0x38] sm:$0xf]
    %v104 = vld [vmem:[#allocation7 + $0x3c] sm:$0xf]
    %v105 = vld [vmem:[#allocation2 + $0x1] sm:$0xff]
    %v106 = vld [vmem:[#allocation2 + $0x9] sm:$0xff]
    %v107 = vld [vmem:[#allocation2 + $0x11] sm:$0xff]
    %v108 = vld [vmem:[#allocation2 + $0x19] sm:$0xff]
    %v109 = vld [vmem:[#allocation2 + $0x21] sm:$0x3]
    %v110 = vpack.c.bf16 %v106, %v105
    %v111 = vpack.c.bf16 %v108, %v107
    %v112 = vpack.c.bf16 %v109, %v109
    %s113 = scalar_lea.vmem [#allocation7], 64
    %v114 = vld [vmem:[%s113] sm:$0xf]
    %v115 = vld [vmem:[%s113 + $0x4] sm:$0xf]
    %v116 = vld [vmem:[%s113 + $0x8] sm:$0xf]
    %v117 = vld [vmem:[%s113 + $0xc] sm:$0xf]
    %v118 = vld [vmem:[%s113 + $0x10] sm:$0xf]
    %v119 = vld [vmem:[%s113 + $0x14] sm:$0xf]
    %v120 = vld [vmem:[%s113 + $0x18] sm:$0xf]
    %v121 = vld [vmem:[%s113 + $0x1c] sm:$0xf]
    %v122 = vld [vmem:[%s113 + $0x20] sm:$0xf]
    %v123 = vld [vmem:[%s113 + $0x24] sm:$0xf]
    %v124 = vld [vmem:[%s113 + $0x28] sm:$0xf]
    %v125 = vld [vmem:[%s113 + $0x2c] sm:$0xf]
    %v126 = vld [vmem:[%s113 + $0x30] sm:$0xf]
    %v127 = vld [vmem:[%s113 + $0x34] sm:$0xf]
    %v128 = vld [vmem:[%s113 + $0x38] sm:$0xf]
    %v129 = vld [vmem:[%s113 + $0x3c] sm:$0xf]
    %v146 = vunpack.c.l.b16 %v114
    %v147 = vunpack.c.l.b16 %v115
    %v148 = vunpack.c.l.b16 %v116
    %v149 = vunpack.c.l.b16 %v117
    %v150 = vunpack.c.l.b16 %v118
    %v151 = vunpack.c.l.b16 %v119
    %v152 = vunpack.c.l.b16 %v120
    %v153 = vunpack.c.l.b16 %v121
    %v154 = vunpack.c.l.b16 %v122
    %v155 = vunpack.c.l.b16 %v123
    %v156 = vunpack.c.l.b16 %v124
    %v157 = vunpack.c.l.b16 %v125
    %v158 = vunpack.c.l.b16 %v126
    %v159 = vunpack.c.l.b16 %v127
    %v160 = vunpack.c.l.b16 %v128
    %v161 = vunpack.c.l.b16 %v129
    %v162 = vpack.c.b16 %v147, %v146
    %v163 = vpack.c.b16 %v149, %v148
    %v164 = vpack.c.b16 %v151, %v150
    %v165 = vpack.c.b16 %v153, %v152
    %v166 = vpack.c.b16 %v155, %v154
    %v167 = vpack.c.b16 %v157, %v156
    %v168 = vpack.c.b16 %v159, %v158
    %v169 = vpack.c.b16 %v161, %v160
    %178 = vmatpush.bf16.msra.mxu0 %v169
    %179 = vmatpush.bf16.msra.mxu0 %v168
    %180 = vmatpush.bf16.msra.mxu0 %v167
    %181 = vmatpush.bf16.msra.mxu0 %v166
    %182 = vmatpush.bf16.msra.mxu0 %v165
    %183 = vmatpush.bf16.msra.mxu0 %v164
    %184 = vmatpush.bf16.msra.mxu0 %v163
    %185 = vmatpush.bf16.msra.mxu0 %v162
    %186 = vmatmul.bf16.gmra.mxu0 %v110
    %v187 = vpop.f32.mrf.mxu0
    %v188 = vadd.f32 0.0, %v187
    %v189 = vpop.f32.mrf.mxu0
    %v190 = vadd.f32 0.0, %v189
    %191 = vmatmul.bf16.gmra.mxu0 %v111
    %v192 = vpop.f32.mrf.mxu0
    %v193 = vadd.f32 0.0, %v192
    %v194 = vpop.f32.mrf.mxu0
    %v195 = vadd.f32 0.0, %v194
    %196 = vmatmul.bf16.gmra.mxu0 %v112
    %v197 = vpop.f32.mrf.mxu0
    %v198 = vadd.f32 0.0, %v197
    %v199 = vpop.f32.mrf.mxu0
    %200 = vdwg.mxu0
    %v217 = vunpack.c.l.b16 %v89
    %v218 = vunpack.c.l.b16 %v90
    %v219 = vunpack.c.l.b16 %v91
    %v220 = vunpack.c.l.b16 %v92
    %v221 = vunpack.c.l.b16 %v93
    %v222 = vunpack.c.l.b16 %v94
    %v223 = vunpack.c.l.b16 %v95
    %v224 = vunpack.c.l.b16 %v96
    %v225 = vunpack.c.l.b16 %v97
    %v226 = vunpack.c.l.b16 %v98
    %v227 = vunpack.c.l.b16 %v99
    %v228 = vunpack.c.l.b16 %v100
    %v229 = vunpack.c.l.b16 %v101
    %v230 = vunpack.c.l.b16 %v102
    %v231 = vunpack.c.l.b16 %v103
    %v232 = vunpack.c.l.b16 %v104
    %v233 = vpack.c.b16 %v218, %v217
    %v234 = vpack.c.b16 %v220, %v219
    %v235 = vpack.c.b16 %v222, %v221
    %v236 = vpack.c.b16 %v224, %v223
    %v237 = vpack.c.b16 %v226, %v225
    %v238 = vpack.c.b16 %v228, %v227
    %v239 = vpack.c.b16 %v230, %v229
    %v240 = vpack.c.b16 %v232, %v231
    %249 = vmatpush.bf16.msra.mxu0 %v240
    %250 = vmatpush.bf16.msra.mxu0 %v239
    %251 = vmatpush.bf16.msra.mxu0 %v238
    %252 = vmatpush.bf16.msra.mxu0 %v237
    %253 = vmatpush.bf16.msra.mxu0 %v236
    %254 = vmatpush.bf16.msra.mxu0 %v235
    %255 = vmatpush.bf16.msra.mxu0 %v234
    %256 = vmatpush.bf16.msra.mxu0 %v233
    %257 = vmatmul.bf16.gmra.mxu0 %v86
    %v258 = vpop.f32.mrf.mxu0
    %v259 = vadd.f32 %v188, %v258
    %v260 = vpop.f32.mrf.mxu0
    %v261 = vadd.f32 %v190, %v260
    %262 = vmatmul.bf16.gmra.mxu0 %v87
    %v263 = vpop.f32.mrf.mxu0
    %v264 = vadd.f32 %v193, %v263
    %v265 = vpop.f32.mrf.mxu0
    %v266 = vadd.f32 %v195, %v265
    %267 = vmatmul.bf16.gmra.mxu0 %v88
    %v268 = vpop.f32.mrf.mxu0
    %v269 = vadd.f32 %v198, %v268
    %v270 = vpop.f32.mrf.mxu0
    %271 = vdwg.mxu0
    %v272 = vld [vmem:[#allocation2 + $0x2] sm:$0xff]
    %v273 = vld [vmem:[#allocation2 + $0xa] sm:$0xff]
    %v274 = vld [vmem:[#allocation2 + $0x12] sm:$0xff]
    %v275 = vld [vmem:[#allocation2 + $0x1a] sm:$0xff]
    %v276 = vld [vmem:[#allocation2 + $0x22] sm:$0x3]
    %v277 = vpack.c.bf16 %v273, %v272
    %v278 = vpack.c.bf16 %v275, %v274
    %v279 = vpack.c.bf16 %v276, %v276
    %s280 = scalar_lea.vmem [#allocation7], 128
    %v281 = vld [vmem:[%s280] sm:$0xf]
    %v282 = vld [vmem:[%s280 + $0x4] sm:$0xf]
    %v283 = vld [vmem:[%s280 + $0x8] sm:$0xf]
    %v284 = vld [vmem:[%s280 + $0xc] sm:$0xf]
    %v285 = vld [vmem:[%s280 + $0x10] sm:$0xf]
    %v286 = vld [vmem:[%s280 + $0x14] sm:$0xf]
    %v287 = vld [vmem:[%s280 + $0x18] sm:$0xf]
    %v288 = vld [vmem:[%s280 + $0x1c] sm:$0xf]
    %v289 = vld [vmem:[%s280 + $0x20] sm:$0xf]
    %v290 = vld [vmem:[%s280 + $0x24] sm:$0xf]
    %v291 = vld [vmem:[%s280 + $0x28] sm:$0xf]
    %v292 = vld [vmem:[%s280 + $0x2c] sm:$0xf]
    %v293 = vld [vmem:[%s280 + $0x30] sm:$0xf]
    %v294 = vld [vmem:[%s280 + $0x34] sm:$0xf]
    %v295 = vld [vmem:[%s280 + $0x38] sm:$0xf]
    %v296 = vld [vmem:[%s280 + $0x3c] sm:$0xf]
    %v313 = vunpack.c.l.b16 %v281
    %v314 = vunpack.c.l.b16 %v282
    %v315 = vunpack.c.l.b16 %v283
    %v316 = vunpack.c.l.b16 %v284
    %v317 = vunpack.c.l.b16 %v285
    %v318 = vunpack.c.l.b16 %v286
    %v319 = vunpack.c.l.b16 %v287
    %v320 = vunpack.c.l.b16 %v288
    %v321 = vunpack.c.l.b16 %v289
    %v322 = vunpack.c.l.b16 %v290
    %v323 = vunpack.c.l.b16 %v291
    %v324 = vunpack.c.l.b16 %v292
    %v325 = vunpack.c.l.b16 %v293
    %v326 = vunpack.c.l.b16 %v294
    %v327 = vunpack.c.l.b16 %v295
    %v328 = vunpack.c.l.b16 %v296
    %v329 = vpack.c.b16 %v314, %v313
    %v330 = vpack.c.b16 %v316, %v315
    %v331 = vpack.c.b16 %v318, %v317
    %v332 = vpack.c.b16 %v320, %v319
    %v333 = vpack.c.b16 %v322, %v321
    %v334 = vpack.c.b16 %v324, %v323
    %v335 = vpack.c.b16 %v326, %v325
    %v336 = vpack.c.b16 %v328, %v327
    %345 = vmatpush.bf16.msra.mxu0 %v336
    %346 = vmatpush.bf16.msra.mxu0 %v335
    %347 = vmatpush.bf16.msra.mxu0 %v334
    %348 = vmatpush.bf16.msra.mxu0 %v333
    %349 = vmatpush.bf16.msra.mxu0 %v332
    %350 = vmatpush.bf16.msra.mxu0 %v331
    %351 = vmatpush.bf16.msra.mxu0 %v330
    %352 = vmatpush.bf16.msra.mxu0 %v329
    %353 = vmatmul.bf16.gmra.mxu0 %v277
    %v354 = vpop.f32.mrf.mxu0
    %v355 = vadd.f32 0.0, %v354
    %v356 = vpop.f32.mrf.mxu0
    %v357 = vadd.f32 0.0, %v356
    %358 = vmatmul.bf16.gmra.mxu0 %v278
    %v359 = vpop.f32.mrf.mxu0
    %v360 = vadd.f32 0.0, %v359
    %v361 = vpop.f32.mrf.mxu0
    %v362 = vadd.f32 0.0, %v361
    %363 = vmatmul.bf16.gmra.mxu0 %v279
    %v364 = vpop.f32.mrf.mxu0
    %v365 = vadd.f32 0.0, %v364
    %v366 = vpop.f32.mrf.mxu0
    %367 = vdwg.mxu0
    %v368 = vadd.f32 %v259, %v355
    %v369 = vadd.f32 %v261, %v357
    %v370 = vadd.f32 %v264, %v360
    %v371 = vadd.f32 %v266, %v362
    %v372 = vadd.f32 %v269, %v365
    %v373 = vld [vmem:[%s2] sm:$0x1]
    %v375 = vperm.slane %v373, 0
    %v377 = vadd.f32 %v368, %v375
    %v378 = vadd.f32 %v369, %v375
    %v379 = vadd.f32 %v370, %v375
    %v380 = vadd.f32 %v371, %v375
    %v381 = vadd.f32 %v372, %v375
    %v382 = vmax.f32 %v377, 0.0
    %v383 = vmax.f32 %v378, 0.0
    %v384 = vmax.f32 %v379, 0.0
    %v385 = vmax.f32 %v380, 0.0
    %v386 = vmax.f32 %v381, 0.0
    %387 = vst [vmem:[#allocation3] sm:$0x1] 0.0
    %388 = vst [vmem:[#allocation3 + $0x1] sm:$0xff] %v382
    %389 = vst [vmem:[#allocation3 + $0x9] sm:$0xff] %v383
    %390 = vst [vmem:[#allocation3 + $0x11] sm:$0x1] 0.0
    %391 = vst [vmem:[#allocation3 + $0x12] sm:$0x1] 0.0
    %392 = vst [vmem:[#allocation3 + $0x11] sm:$0xfc] %v384
    %393 = vst [vmem:[#allocation3 + $0x19] sm:$0xff] %v385
    %394 = vst [vmem:[#allocation3 + $0x21] sm:$0x3] %v386
    %395 = vst [vmem:[#allocation3 + $0x23] sm:$0x1] 0.0
    %v396 = vld [vmem:[#allocation3] sm:$0xff]
    %v397 = vld [vmem:[#allocation3 + $0x8] sm:$0xff]
    %v398 = vld [vmem:[#allocation3 + $0x10] sm:$0xff]
    %v399 = vld [vmem:[#allocation3 + $0x18] sm:$0xff]
    %v400 = vld [vmem:[#allocation3 + $0x20] sm:$0x3]
    %v401 = vpack.c.bf16 %v397, %v396
    %v402 = vpack.c.bf16 %v399, %v398
    %v403 = vpack.c.bf16 %v400, %v400
    %v404 = vld [vmem:[#allocation9] sm:$0xf]
    %v405 = vld [vmem:[#allocation9 + $0x4] sm:$0xf]
    %v406 = vld [vmem:[#allocation9 + $0x8] sm:$0xf]
    %v407 = vld [vmem:[#allocation9 + $0xc] sm:$0xf]
    %v408 = vld [vmem:[#allocation9 + $0x10] sm:$0xf]
    %v409 = vld [vmem:[#allocation9 + $0x14] sm:$0xf]
    %v410 = vld [vmem:[#allocation9 + $0x18] sm:$0xf]
    %v411 = vld [vmem:[#allocation9 + $0x1c] sm:$0xf]
    %v412 = vld [vmem:[#allocation9 + $0x20] sm:$0xf]
    %v413 = vld [vmem:[#allocation9 + $0x24] sm:$0xf]
    %v414 = vld [vmem:[#allocation9 + $0x28] sm:$0xf]
    %v415 = vld [vmem:[#allocation9 + $0x2c] sm:$0xf]
    %v416 = vld [vmem:[#allocation9 + $0x30] sm:$0xf]
    %v417 = vld [vmem:[#allocation9 + $0x34] sm:$0xf]
    %v418 = vld [vmem:[#allocation9 + $0x38] sm:$0xf]
    %v419 = vld [vmem:[#allocation9 + $0x3c] sm:$0xf]
    %v420 = vld [vmem:[#allocation3 + $0x1] sm:$0xff]
    %v421 = vld [vmem:[#allocation3 + $0x9] sm:$0xff]
    %v422 = vld [vmem:[#allocation3 + $0x11] sm:$0xff]
    %v423 = vld [vmem:[#allocation3 + $0x19] sm:$0xff]
    %v424 = vld [vmem:[#allocation3 + $0x21] sm:$0x3]
    %v425 = vpack.c.bf16 %v421, %v420
    %v426 = vpack.c.bf16 %v423, %v422
    %v427 = vpack.c.bf16 %v424, %v424
    %s428 = scalar_lea.vmem [#allocation9], 64
    %v429 = vld [vmem:[%s428] sm:$0xf]
    %v430 = vld [vmem:[%s428 + $0x4] sm:$0xf]
    %v431 = vld [vmem:[%s428 + $0x8] sm:$0xf]
    %v432 = vld [vmem:[%s428 + $0xc] sm:$0xf]
    %v433 = vld [vmem:[%s428 + $0x10] sm:$0xf]
    %v434 = vld [vmem:[%s428 + $0x14] sm:$0xf]
    %v435 = vld [vmem:[%s428 + $0x18] sm:$0xf]
    %v436 = vld [vmem:[%s428 + $0x1c] sm:$0xf]
    %v437 = vld [vmem:[%s428 + $0x20] sm:$0xf]
    %v438 = vld [vmem:[%s428 + $0x24] sm:$0xf]
    %v439 = vld [vmem:[%s428 + $0x28] sm:$0xf]
    %v440 = vld [vmem:[%s428 + $0x2c] sm:$0xf]
    %v441 = vld [vmem:[%s428 + $0x30] sm:$0xf]
    %v442 = vld [vmem:[%s428 + $0x34] sm:$0xf]
    %v443 = vld [vmem:[%s428 + $0x38] sm:$0xf]
    %v444 = vld [vmem:[%s428 + $0x3c] sm:$0xf]
    %v461 = vunpack.c.l.b16 %v429
    %v462 = vunpack.c.l.b16 %v430
    %v463 = vunpack.c.l.b16 %v431
    %v464 = vunpack.c.l.b16 %v432
    %v465 = vunpack.c.l.b16 %v433
    %v466 = vunpack.c.l.b16 %v434
    %v467 = vunpack.c.l.b16 %v435
    %v468 = vunpack.c.l.b16 %v436
    %v469 = vunpack.c.l.b16 %v437
    %v470 = vunpack.c.l.b16 %v438
    %v471 = vunpack.c.l.b16 %v439
    %v472 = vunpack.c.l.b16 %v440
    %v473 = vunpack.c.l.b16 %v441
    %v474 = vunpack.c.l.b16 %v442
    %v475 = vunpack.c.l.b16 %v443
    %v476 = vunpack.c.l.b16 %v444
    %v477 = vpack.c.b16 %v462, %v461
    %v478 = vpack.c.b16 %v464, %v463
    %v479 = vpack.c.b16 %v466, %v465
    %v480 = vpack.c.b16 %v468, %v467
    %v481 = vpack.c.b16 %v470, %v469
    %v482 = vpack.c.b16 %v472, %v471
    %v483 = vpack.c.b16 %v474, %v473
    %v484 = vpack.c.b16 %v476, %v475
    %493 = vmatpush.bf16.msra.mxu0 %v484
    %494 = vmatpush.bf16.msra.mxu0 %v483
    %495 = vmatpush.bf16.msra.mxu0 %v482
    %496 = vmatpush.bf16.msra.mxu0 %v481
    %497 = vmatpush.bf16.msra.mxu0 %v480
    %498 = vmatpush.bf16.msra.mxu0 %v479
    %499 = vmatpush.bf16.msra.mxu0 %v478
    %500 = vmatpush.bf16.msra.mxu0 %v477
    %501 = vmatmul.bf16.gmra.mxu0 %v425
    %v502 = vpop.f32.mrf.mxu0
    %v503 = vadd.f32 0.0, %v502
    %v504 = vpop.f32.mrf.mxu0
    %v505 = vadd.f32 0.0, %v504
    %506 = vmatmul.bf16.gmra.mxu0 %v426
    %v507 = vpop.f32.mrf.mxu0
    %v508 = vadd.f32 0.0, %v507
    %v509 = vpop.f32.mrf.mxu0
    %v510 = vadd.f32 0.0, %v509
    %511 = vmatmul.bf16.gmra.mxu0 %v427
    %v512 = vpop.f32.mrf.mxu0
    %v513 = vadd.f32 0.0, %v512
    %v514 = vpop.f32.mrf.mxu0
    %515 = vdwg.mxu0
    %v532 = vunpack.c.l.b16 %v404
    %v533 = vunpack.c.l.b16 %v405
    %v534 = vunpack.c.l.b16 %v406
    %v535 = vunpack.c.l.b16 %v407
    %v536 = vunpack.c.l.b16 %v408
    %v537 = vunpack.c.l.b16 %v409
    %v538 = vunpack.c.l.b16 %v410
    %v539 = vunpack.c.l.b16 %v411
    %v540 = vunpack.c.l.b16 %v412
    %v541 = vunpack.c.l.b16 %v413
    %v542 = vunpack.c.l.b16 %v414
    %v543 = vunpack.c.l.b16 %v415
    %v544 = vunpack.c.l.b16 %v416
    %v545 = vunpack.c.l.b16 %v417
    %v546 = vunpack.c.l.b16 %v418
    %v547 = vunpack.c.l.b16 %v419
    %v548 = vpack.c.b16 %v533, %v532
    %v549 = vpack.c.b16 %v535, %v534
    %v550 = vpack.c.b16 %v537, %v536
    %v551 = vpack.c.b16 %v539, %v538
    %v552 = vpack.c.b16 %v541, %v540
    %v553 = vpack.c.b16 %v543, %v542
    %v554 = vpack.c.b16 %v545, %v544
    %v555 = vpack.c.b16 %v547, %v546
    %564 = vmatpush.bf16.msra.mxu0 %v555
    %565 = vmatpush.bf16.msra.mxu0 %v554
    %566 = vmatpush.bf16.msra.mxu0 %v553
    %567 = vmatpush.bf16.msra.mxu0 %v552
    %568 = vmatpush.bf16.msra.mxu0 %v551
    %569 = vmatpush.bf16.msra.mxu0 %v550
    %570 = vmatpush.bf16.msra.mxu0 %v549
    %571 = vmatpush.bf16.msra.mxu0 %v548
    %572 = vmatmul.bf16.gmra.mxu0 %v401
    %v573 = vpop.f32.mrf.mxu0
    %v574 = vadd.f32 %v503, %v573
    %v575 = vpop.f32.mrf.mxu0
    %v576 = vadd.f32 %v505, %v575
    %577 = vmatmul.bf16.gmra.mxu0 %v402
    %v578 = vpop.f32.mrf.mxu0
    %v579 = vadd.f32 %v508, %v578
    %v580 = vpop.f32.mrf.mxu0
    %v581 = vadd.f32 %v510, %v580
    %582 = vmatmul.bf16.gmra.mxu0 %v403
    %v583 = vpop.f32.mrf.mxu0
    %v584 = vadd.f32 %v513, %v583
    %v585 = vpop.f32.mrf.mxu0
    %586 = vdwg.mxu0
    %v587 = vld [vmem:[#allocation3 + $0x2] sm:$0xff]
    %v588 = vld [vmem:[#allocation3 + $0xa] sm:$0xff]
    %v589 = vld [vmem:[#allocation3 + $0x12] sm:$0xff]
    %v590 = vld [vmem:[#allocation3 + $0x1a] sm:$0xff]
    %v591 = vld [vmem:[#allocation3 + $0x22] sm:$0x3]
    %v592 = vpack.c.bf16 %v588, %v587
    %v593 = vpack.c.bf16 %v590, %v589
    %v594 = vpack.c.bf16 %v591, %v591
    %s595 = scalar_lea.vmem [#allocation9], 128
    %v596 = vld [vmem:[%s595] sm:$0xf]
    %v597 = vld [vmem:[%s595 + $0x4] sm:$0xf]
    %v598 = vld [vmem:[%s595 + $0x8] sm:$0xf]
    %v599 = vld [vmem:[%s595 + $0xc] sm:$0xf]
    %v600 = vld [vmem:[%s595 + $0x10] sm:$0xf]
    %v601 = vld [vmem:[%s595 + $0x14] sm:$0xf]
    %v602 = vld [vmem:[%s595 + $0x18] sm:$0xf]
    %v603 = vld [vmem:[%s595 + $0x1c] sm:$0xf]
    %v604 = vld [vmem:[%s595 + $0x20] sm:$0xf]
    %v605 = vld [vmem:[%s595 + $0x24] sm:$0xf]
    %v606 = vld [vmem:[%s595 + $0x28] sm:$0xf]
    %v607 = vld [vmem:[%s595 + $0x2c] sm:$0xf]
    %v608 = vld [vmem:[%s595 + $0x30] sm:$0xf]
    %v609 = vld [vmem:[%s595 + $0x34] sm:$0xf]
    %v610 = vld [vmem:[%s595 + $0x38] sm:$0xf]
    %v611 = vld [vmem:[%s595 + $0x3c] sm:$0xf]
    %v628 = vunpack.c.l.b16 %v596
    %v629 = vunpack.c.l.b16 %v597
    %v630 = vunpack.c.l.b16 %v598
    %v631 = vunpack.c.l.b16 %v599
    %v632 = vunpack.c.l.b16 %v600
    %v633 = vunpack.c.l.b16 %v601
    %v634 = vunpack.c.l.b16 %v602
    %v635 = vunpack.c.l.b16 %v603
    %v636 = vunpack.c.l.b16 %v604
    %v637 = vunpack.c.l.b16 %v605
    %v638 = vunpack.c.l.b16 %v606
    %v639 = vunpack.c.l.b16 %v607
    %v640 = vunpack.c.l.b16 %v608
    %v641 = vunpack.c.l.b16 %v609
    %v642 = vunpack.c.l.b16 %v610
    %v643 = vunpack.c.l.b16 %v611
    %v644 = vpack.c.b16 %v629, %v628
    %v645 = vpack.c.b16 %v631, %v630
    %v646 = vpack.c.b16 %v633, %v632
    %v647 = vpack.c.b16 %v635, %v634
    %v648 = vpack.c.b16 %v637, %v636
    %v649 = vpack.c.b16 %v639, %v638
    %v650 = vpack.c.b16 %v641, %v640
    %v651 = vpack.c.b16 %v643, %v642
    %660 = vmatpush.bf16.msra.mxu0 %v651
    %661 = vmatpush.bf16.msra.mxu0 %v650
    %662 = vmatpush.bf16.msra.mxu0 %v649
    %663 = vmatpush.bf16.msra.mxu0 %v648
    %664 = vmatpush.bf16.msra.mxu0 %v647
    %665 = vmatpush.bf16.msra.mxu0 %v646
    %666 = vmatpush.bf16.msra.mxu0 %v645
    %667 = vmatpush.bf16.msra.mxu0 %v644
    %668 = vmatmul.bf16.gmra.mxu0 %v592
    %v669 = vpop.f32.mrf.mxu0
    %v670 = vadd.f32 0.0, %v669
    %v671 = vpop.f32.mrf.mxu0
    %v672 = vadd.f32 0.0, %v671
    %673 = vmatmul.bf16.gmra.mxu0 %v593
    %v674 = vpop.f32.mrf.mxu0
    %v675 = vadd.f32 0.0, %v674
    %v676 = vpop.f32.mrf.mxu0
    %v677 = vadd.f32 0.0, %v676
    %678 = vmatmul.bf16.gmra.mxu0 %v594
    %v679 = vpop.f32.mrf.mxu0
    %v680 = vadd.f32 0.0, %v679
    %v681 = vpop.f32.mrf.mxu0
    %682 = vdwg.mxu0
    %v683 = vadd.f32 %v574, %v670
    %v684 = vadd.f32 %v576, %v672
    %v685 = vadd.f32 %v579, %v675
    %v686 = vadd.f32 %v581, %v677
    %v687 = vadd.f32 %v584, %v680
    %v688 = vld [vmem:[%s4] sm:$0x1]
    %v690 = vperm.slane %v688, 0
    %v692 = vadd.f32 %v683, %v690
    %v693 = vadd.f32 %v684, %v690
    %v694 = vadd.f32 %v685, %v690
    %v695 = vadd.f32 %v686, %v690
    %v696 = vadd.f32 %v687, %v690
    %v697 = vmax.f32 %v692, 0.0
    %v698 = vmax.f32 %v693, 0.0
    %v699 = vmax.f32 %v694, 0.0
    %v700 = vmax.f32 %v695, 0.0
    %v701 = vmax.f32 %v696, 0.0
    %702 = vst [vmem:[#allocation10] sm:$0xff] %v697
    %703 = vst [vmem:[#allocation10 + $0x8] sm:$0xff] %v698
    %s704 = scalar_lea.vmem [#allocation10], 16
    %705 = vst [vmem:[%s704 - $0x2] sm:$0xfc] %v699
    %706 = vst [vmem:[%s704 + $0x6] sm:$0xff] %v700
    %707 = vst [vmem:[%s704 + $0xe] sm:$0x3] %v701
    // Predicated region
    $region34: #{tpu_custom_call.1} parent=1 // pred_check
      _
    $region35: #{tpu_custom_call.1} parent=1 // pred_check_branch
      %709 = sbr.rel (0) target = $region37
    $region36: #{tpu_custom_call.1} parent=1 // pred_region
      %711 = vsyncadd [#allocation6], 0
      %s712 = sshll.u32 [#allocation10], 4
      %s713 = int_to_ptr.vmem [resolvable:$true] %s712
      %s714 = sshll.u32 %s5, 4
      %s715 = int_to_ptr.hbm [resolvable:$true] %s714
      %720 = dma.vmem_to_hbm [thread:$0]  %s713, 512, %s715, [#allocation6], 128, 128, 8
    $region37: #{tpu_custom_call.1} parent=1 // pred_fallthru
      _
    // Predicated region
    $region38: #{tpu_custom_call.1} parent=1 // pred_check
      _
    $region39: #{tpu_custom_call.1} parent=1 // pred_check_branch
      %722 = sbr.rel (0) target = $region41
    $region40: #{tpu_custom_call.1} parent=1 // pred_region
      %724 = dma.done [#allocation6], 512
    $region41: #{tpu_custom_call.1} parent=1 // pred_fallthru
      _
    %725 = vsyncpa [#allocation5], 1
    %726 = vsyncpa [#allocation8], 1
    %727 = vsyncpa [#allocation6], 1

</llo_original>
